<compile_context>
chip_gen: v6e
topology: v6e:2x2x1
jax: 0.10.0
libtpu: 0.0.40
codegen_flags: <defaults>
</compile_context>

<pallas_src>
import functools

import jax
import jax.numpy as jnp
from jax.experimental import pallas as pl
from jax.experimental.pallas import tpu as pltpu


TILE_B_DEFAULT = 1024  # rows per grid step for large batches (multiple of 8)


def regression_net_kernel(x_ref, w1_ref, b1_ref, w2_ref, b2_ref, w3_ref, b3_ref, o_ref):
    # x tile arrives as f32; cast to bf16 on the VPU (hidden under the input DMA).
    x = x_ref[...].astype(jnp.bfloat16)

    # fc1 + relu : bf16 operands on the MXU, f32 accumulation, f32 bias/ReLU on the VPU.
    h1 = jnp.dot(x, w1_ref[...], preferred_element_type=jnp.float32) + b1_ref[...]
    h1 = jnp.maximum(h1, 0.0)

    # fc2 + relu : feed bf16 back into the MXU, accumulate f32.
    h2 = jnp.dot(h1.astype(jnp.bfloat16), w2_ref[...],
                 preferred_element_type=jnp.float32) + b2_ref[...]
    h2 = jnp.maximum(h2, 0.0)

    # fc3 (20 -> 1) as VPU multiply + lane (XLU) reduction instead of an N=1 MXU matmul.
    out = jnp.sum(h2 * w3_ref[...], axis=-1, keepdims=True) + b3_ref[...]  # (tile_b, 1) f32

    # Narrow (tile_b, 1) store; masked vst but only tile_b/8 vregs per step.
    o_ref[...] = out.astype(o_ref.dtype)


@functools.partial(jax.jit, static_argnames=("tile_b",))
def regression_net_forward(x, params, tile_b=None):
    """x: (B, input_dim) float32. params: dict with pre-transposed weights.

    Returns (B, 1) float32, matching RegressionNet.forward.
    """
    B, D = x.shape
    if tile_b is None:
        tile_b = min(TILE_B_DEFAULT, B)
    tile_b = min(tile_b, B)  # tile must not exceed the batch; B itself is always legal

    grid = (pl.cdiv(B, tile_b),)  # ragged last tile handled by Pallas (no jnp.pad copy)

    # bf16 weights at the kernel boundary (tiny, reused every step); biases stay f32.
    w1 = params["w1"].astype(jnp.bfloat16)
    w2 = params["w2"].astype(jnp.bfloat16)
    w3 = params["w3"]                       # (1, 20) f32 row, used on the VPU
    b1, b2, b3 = params["b1"], params["b2"], params["b3"]

    # Weights/biases pinned in VMEM across grid steps via constant index_maps.
    def const_spec(shape):
        return pl.BlockSpec(shape, lambda i: tuple(0 for _ in shape))

    H1, H2 = w1.shape[1], w2.shape[1]
    cost = pl.CostEstimate(
        flops=2 * B * (D * H1 + H1 * H2 + H2),
        transcendentals=0,
        bytes_accessed=int(
            B * D * 4                          # x (f32, read once)
            + (D * H1 + H1 * H2) * 2           # bf16 weights
            + (H1 + H2 + H2 + 1) * 4           # f32 biases + fc3 row
            + B * 4                            # narrow (B, 1) f32 output
        ),
    )

    out = pl.pallas_call(
        regression_net_kernel,
        out_shape=jax.ShapeDtypeStruct((B, 1), jnp.float32),
        grid=grid,
        in_specs=[
            pl.BlockSpec((tile_b, D), lambda i: (i, 0)),   # x: tiled over batch
            const_spec(w1.shape), const_spec(b1.shape),
            const_spec(w2.shape), const_spec(b2.shape),
            const_spec(w3.shape), const_spec(b3.shape),
        ],
        out_specs=pl.BlockSpec((tile_b, 1), lambda i: (i, 0)),
        compiler_params=pltpu.CompilerParams(
            dimension_semantics=("parallel",),             # megacore split on v7x
        ),
        cost_estimate=cost,
    )(x, w1, b1, w2, b2, w3, b3)

    return out


def init_params(key, input_dim):
    """Deterministic synthetic parameters matching nn.Linear shapes.

    PyTorch nn.Linear(in, out) has weight (out, in), bias (out,).
    We store the transpose (in, out) and bias as (1, out) so the kernel computes
    y = x @ W + b directly; fc3's weight is kept as a (1, 20) row for the VPU reduce.
    """
    k1, k2, k3, k4, k5, k6 = jax.random.split(key, 6)
    scale = 0.1
    return {
        "w1": scale * jax.random.normal(k1, (input_dim, 50), jnp.float32),
        "b1": scale * jax.random.normal(k2, (1, 50), jnp.float32),
        "w2": scale * jax.random.normal(k3, (50, 20), jnp.float32),
        "b2": scale * jax.random.normal(k4, (1, 20), jnp.float32),
        "w3": scale * jax.random.normal(k5, (1, 20), jnp.float32),   # fc3 weight as row
        "b3": scale * jax.random.normal(k6, (1, 1), jnp.float32),
    }


def reference_forward(x, p):
    """Pure-JAX reference mirroring the kernel's bf16-operand / f32-accumulate math."""
    xb = x.astype(jnp.bfloat16)
    w1 = p["w1"].astype(jnp.bfloat16)
    w2 = p["w2"].astype(jnp.bfloat16)
    h1 = jnp.maximum(jnp.dot(xb, w1, preferred_element_type=jnp.float32) + p["b1"], 0.0)
    h2 = jnp.maximum(
        jnp.dot(h1.astype(jnp.bfloat16), w2, preferred_element_type=jnp.float32) + p["b2"],
        0.0)
    return jnp.sum(h2 * p["w3"], axis=-1, keepdims=True) + p["b3"]


if __name__ == "__main__":
    key = jax.random.PRNGKey(0)
    k_x, k_p = jax.random.split(key)

    batch, input_dim = 8, 32
    params = init_params(k_p, input_dim)

    # Small single-block case.
    x = jax.random.normal(k_x, (batch, input_dim), jnp.float32)
    out = jax.block_until_ready(regression_net_forward(x, params))
    ref = reference_forward(x, params)
    assert out.shape == (batch, 1), out.shape
    assert jnp.allclose(out, ref, atol=1e-3, rtol=1e-3), "mismatch vs reference (small)"

    # Multi-step grid case (batch tiled across several kernel invocations).
    x2 = jax.random.normal(k_x, (256, input_dim), jnp.float32)
    out2 = jax.block_until_ready(regression_net_forward(x2, params, tile_b=64))
    ref2 = reference_forward(x2, params)
    assert out2.shape == (256, 1), out2.shape
    assert jnp.allclose(out2, ref2, atol=1e-3, rtol=1e-3), "mismatch vs reference (tiled)"

    print("KERNEL_OK")
</pallas_src>

<mosaic_0001>
module attributes {stable_mosaic.version = 11 : i64} {
  func.func @regression_net_kernel(%arg0: i32, %arg1: memref<8x32xf32, #tpu.memory_space<vmem>>, %arg2: memref<32x50xbf16, #tpu.memory_space<vmem>>, %arg3: memref<1x50xf32, #tpu.memory_space<vmem>>, %arg4: memref<50x20xbf16, #tpu.memory_space<vmem>>, %arg5: memref<1x20xf32, #tpu.memory_space<vmem>>, %arg6: memref<1x20xf32, #tpu.memory_space<vmem>>, %arg7: memref<1x1xf32, #tpu.memory_space<vmem>>, %arg8: memref<8x1xf32, #tpu.memory_space<vmem>>) attributes {dimension_semantics = [#tpu.dimension_semantics<parallel>], iteration_bounds = array<i64: 1>, scalar_prefetch = 0 : i64, scratch_operands = 0 : i64, tpu.core_type = #tpu.core_type<tc>, window_params = [{transform_indices = @transform_0, window_bounds = array<i64: 8, 32>}, {pipeline_mode = #tpu.pipeline_mode<synchronous>, transform_indices = @transform_1, window_bounds = array<i64: 32, 50>}, {pipeline_mode = #tpu.pipeline_mode<synchronous>, transform_indices = @transform_2, window_bounds = array<i64: 1, 50>}, {pipeline_mode = #tpu.pipeline_mode<synchronous>, transform_indices = @transform_3, window_bounds = array<i64: 50, 20>}, {pipeline_mode = #tpu.pipeline_mode<synchronous>, transform_indices = @transform_4, window_bounds = array<i64: 1, 20>}, {pipeline_mode = #tpu.pipeline_mode<synchronous>, transform_indices = @transform_5, window_bounds = array<i64: 1, 20>}, {pipeline_mode = #tpu.pipeline_mode<synchronous>, transform_indices = @transform_6, window_bounds = array<i64: 1, 1>}, {transform_indices = @transform_7, window_bounds = array<i64: 8, 1>}]} {
    %c0 = arith.constant 0 : index
    %c0_0 = arith.constant 0 : index
    %0 = vector.load %arg1[%c0, %c0_0] : memref<8x32xf32, #tpu.memory_space<vmem>>, vector<8x32xf32>
    %1 = arith.truncf %0 : vector<8x32xf32> to vector<8x32xbf16>
    %c0_1 = arith.constant 0 : index
    %c0_2 = arith.constant 0 : index
    %2 = vector.load %arg2[%c0_1, %c0_2] : memref<32x50xbf16, #tpu.memory_space<vmem>>, vector<32x50xbf16>
    %cst = arith.constant dense<0.000000e+00> : vector<8x50xf32>
    %3 = tpu.matmul %1, %2, %cst {dimension_numbers = #tpu.dot_dimension_numbers<[1], [0], [0], [1], [0, 0, 1, 1], [], []>} : vector<8x32xbf16>, vector<32x50xbf16>, vector<8x50xf32> -> vector<8x50xf32>
    %c0_3 = arith.constant 0 : index
    %c0_4 = arith.constant 0 : index
    %4 = vector.load %arg3[%c0_3, %c0_4] : memref<1x50xf32, #tpu.memory_space<vmem>>, vector<1x50xf32>
    %5 = vector.broadcast %4 : vector<1x50xf32> to vector<8x50xf32>
    %6 = arith.addf %3, %5 : vector<8x50xf32>
    %cst_5 = arith.constant 0.000000e+00 : f32
    %7 = vector.broadcast %cst_5 : f32 to vector<8x50xf32>
    %8 = arith.maximumf %6, %7 : vector<8x50xf32>
    %9 = arith.truncf %8 : vector<8x50xf32> to vector<8x50xbf16>
    %c0_6 = arith.constant 0 : index
    %c0_7 = arith.constant 0 : index
    %10 = vector.load %arg4[%c0_6, %c0_7] : memref<50x20xbf16, #tpu.memory_space<vmem>>, vector<50x20xbf16>
    %cst_8 = arith.constant dense<0.000000e+00> : vector<8x20xf32>
    %11 = tpu.matmul %9, %10, %cst_8 {dimension_numbers = #tpu.dot_dimension_numbers<[1], [0], [0], [1], [0, 0, 1, 1], [], []>} : vector<8x50xbf16>, vector<50x20xbf16>, vector<8x20xf32> -> vector<8x20xf32>
    %c0_9 = arith.constant 0 : index
    %c0_10 = arith.constant 0 : index
    %12 = vector.load %arg5[%c0_9, %c0_10] : memref<1x20xf32, #tpu.memory_space<vmem>>, vector<1x20xf32>
    %13 = vector.broadcast %12 : vector<1x20xf32> to vector<8x20xf32>
    %14 = arith.addf %11, %13 : vector<8x20xf32>
    %cst_11 = arith.constant 0.000000e+00 : f32
    %15 = vector.broadcast %cst_11 : f32 to vector<8x20xf32>
    %16 = arith.maximumf %14, %15 : vector<8x20xf32>
    %c0_12 = arith.constant 0 : index
    %c0_13 = arith.constant 0 : index
    %17 = vector.load %arg6[%c0_12, %c0_13] : memref<1x20xf32, #tpu.memory_space<vmem>>, vector<1x20xf32>
    %18 = vector.broadcast %17 : vector<1x20xf32> to vector<8x20xf32>
    %19 = arith.mulf %16, %18 : vector<8x20xf32>
    %cst_14 = arith.constant dense<0.000000e+00> : vector<8xf32>
    %20 = vector.multi_reduction <add>, %19, %cst_14 [1] : vector<8x20xf32> to vector<8xf32>
    %21 = vector.shape_cast %20 : vector<8xf32> to vector<8x1xf32>
    %c0_15 = arith.constant 0 : index
    %c0_16 = arith.constant 0 : index
    %22 = vector.load %arg7[%c0_15, %c0_16] : memref<1x1xf32, #tpu.memory_space<vmem>>, vector<1x1xf32>
    %23 = vector.broadcast %22 : vector<1x1xf32> to vector<8x1xf32>
    %24 = arith.addf %21, %23 : vector<8x1xf32>
    %c0_17 = arith.constant 0 : index
    %c0_18 = arith.constant 0 : index
    %25 = vector.load %arg8[%c0_17, %c0_18] : memref<8x1xf32, #tpu.memory_space<vmem>>, vector<8x1xf32>
    tpu.vector_store %arg8[%c0_17, %c0_18], %24 {strides = array<i32>} : memref<8x1xf32, #tpu.memory_space<vmem>>, vector<8x1xf32>,
    return
  }
  func.func @transform_0(%arg0: i32) -> (i32, i32) {
    %c0_i32 = arith.constant 0 : i32
    %c0_i32_0 = arith.constant 0 : i32
    return %arg0, %c0_i32 : i32, i32
  }
  func.func @transform_1(%arg0: i32) -> (i32, i32) {
    %c0_i32 = arith.constant 0 : i32
    %c0_i32_0 = arith.constant 0 : i32
    %c0_i32_1 = arith.constant 0 : i32
    return %c0_i32, %c0_i32_0 : i32, i32
  }
  func.func @transform_2(%arg0: i32) -> (i32, i32) {
    %c0_i32 = arith.constant 0 : i32
    %c0_i32_0 = arith.constant 0 : i32
    %c0_i32_1 = arith.constant 0 : i32
    return %c0_i32, %c0_i32_0 : i32, i32
  }
  func.func @transform_3(%arg0: i32) -> (i32, i32) {
    %c0_i32 = arith.constant 0 : i32
    %c0_i32_0 = arith.constant 0 : i32
    %c0_i32_1 = arith.constant 0 : i32
    return %c0_i32, %c0_i32_0 : i32, i32
  }
  func.func @transform_4(%arg0: i32) -> (i32, i32) {
    %c0_i32 = arith.constant 0 : i32
    %c0_i32_0 = arith.constant 0 : i32
    %c0_i32_1 = arith.constant 0 : i32
    return %c0_i32, %c0_i32_0 : i32, i32
  }
  func.func @transform_5(%arg0: i32) -> (i32, i32) {
    %c0_i32 = arith.constant 0 : i32
    %c0_i32_0 = arith.constant 0 : i32
    %c0_i32_1 = arith.constant 0 : i32
    return %c0_i32, %c0_i32_0 : i32, i32
  }
  func.func @transform_6(%arg0: i32) -> (i32, i32) {
    %c0_i32 = arith.constant 0 : i32
    %c0_i32_0 = arith.constant 0 : i32
    %c0_i32_1 = arith.constant 0 : i32
    return %c0_i32, %c0_i32_0 : i32, i32
  }
  func.func @transform_7(%arg0: i32) -> (i32, i32) {
    %c0_i32 = arith.constant 0 : i32
    %c0_i32_0 = arith.constant 0 : i32
    return %arg0, %c0_i32 : i32, i32
  }
}

</mosaic_0001>

<llo_original>
// kernel: regression_net_forward.1
$region0: #{regression_net_forward.1}
  #allocation0 [shape = 'u32[]', space=smem, size = 0x4, offset = 0x4, fixed_abs, tag = 'smem constant byte address 0x4 - core index']
  #allocation1 [shape = 'u32[144,128]{1,0:T(1,128)}', space=vmem, size = 0x12000, scoped, tag = 'internal scratch']
  #allocation2 [shape = 'f32[1,1]{1,0:T(1,128)S(1)}', space=vmem, size = 0x200, scoped, tag = 'scoped memory for regression_net_forward.1']
  %s0 = inlined_call_operand.vmem [shape: f32[8,32], index: 0, kind: input, shape index: {}]
  %s1 = inlined_call_operand.vmem [shape: bf16[32,50], index: 1, kind: input, shape index: {}]
  %s2 = inlined_call_operand.vmem [shape: f32[1,50], index: 2, kind: input, shape index: {}]
  %s3 = inlined_call_operand.vmem [shape: bf16[50,20], index: 3, kind: input, shape index: {}]
  %s4 = inlined_call_operand.vmem [shape: f32[1,20], index: 4, kind: input, shape index: {}]
  %s5 = inlined_call_operand.vmem [shape: f32[1,20], index: 5, kind: input, shape index: {}]
  %s6 = inlined_call_operand.<no memory space> [shape: f32[1,1], index: 6, kind: input, shape index: {}]
  %s7 = inlined_call_operand.vmem [shape: f32[8,1], index: 7, kind: output, shape index: {}]
  %s8 = sld [smem:[#allocation0]]
  $region38: #{regression_net_forward.1} parent=0
    _
  %s10 = ssub.s32 1, %s8
  %s11 = scalar_select 0, %s10, %s8
  %v12 = vstv %s6
  %13 = vst [vmem:[#allocation2] sm:$0x1] %v12
  // Predicated region
  $region2: #{regression_net_forward.1} parent=0 // pred_check
    _
  $region3: #{regression_net_forward.1} parent=0 // pred_check_branch
    %15 = sbr.rel (0) target = $region5
  $region4: #{regression_net_forward.1} parent=0 // pred_region
    _
  $region5: #{regression_net_forward.1} parent=0 // pred_fallthru
    _
  // Predicated region
  $region6: #{regression_net_forward.1} parent=0 // pred_check
    _
  $region7: #{regression_net_forward.1} parent=0 // pred_check_branch
    %17 = sbr.rel (0) target = $region9
  $region8: #{regression_net_forward.1} parent=0 // pred_region
    _
  $region9: #{regression_net_forward.1} parent=0 // pred_fallthru
    _
  // Predicated region
  $region10: #{regression_net_forward.1} parent=0 // pred_check
    _
  $region11: #{regression_net_forward.1} parent=0 // pred_check_branch
    %19 = sbr.rel (0) target = $region13
  $region12: #{regression_net_forward.1} parent=0 // pred_region
    _
  $region13: #{regression_net_forward.1} parent=0 // pred_fallthru
    _
  // Predicated region
  $region14: #{regression_net_forward.1} parent=0 // pred_check
    _
  $region15: #{regression_net_forward.1} parent=0 // pred_check_branch
    %21 = sbr.rel (0) target = $region17
  $region16: #{regression_net_forward.1} parent=0 // pred_region
    _
  $region17: #{regression_net_forward.1} parent=0 // pred_fallthru
    _
  // Predicated region
  $region18: #{regression_net_forward.1} parent=0 // pred_check
    _
  $region19: #{regression_net_forward.1} parent=0 // pred_check_branch
    %23 = sbr.rel (0) target = $region21
  $region20: #{regression_net_forward.1} parent=0 // pred_region
    _
  $region21: #{regression_net_forward.1} parent=0 // pred_fallthru
    _
  // Predicated region
  $region22: #{regression_net_forward.1} parent=0 // pred_check
    _
  $region23: #{regression_net_forward.1} parent=0 // pred_check_branch
    %25 = sbr.rel (0) target = $region25
  $region24: #{regression_net_forward.1} parent=0 // pred_region
    _
  $region25: #{regression_net_forward.1} parent=0 // pred_fallthru
    _
  // Predicated region
  $region26: #{regression_net_forward.1} parent=0 // pred_check
    _
  $region27: #{regression_net_forward.1} parent=0 // pred_check_branch
    %27 = sbr.rel (0) target = $region29
  $region28: #{regression_net_forward.1} parent=0 // pred_region
    _
  $region29: #{regression_net_forward.1} parent=0 // pred_fallthru
    _
  %v29 = vld [vmem:[%s0] sm:$0xff]
  %v30 = vpack.c.bf16 %v29, %v29
  %v31 = vld [vmem:[%s1] sm:$0xf]
  %v32 = vld [vmem:[%s1 + $0x4] sm:$0xf]
  %v33 = vld [vmem:[%s1 + $0x8] sm:$0xf]
  %v34 = vld [vmem:[%s1 + $0xc] sm:$0xf]
  %v35 = vld [vmem:[%s2] sm:$0x1]
  %v37 = vlaneseq
  %v38 = vshrl.u32 %v37, 7
  %v39 = vsub.s32 0, %v38
  %v40 = vrot.slane %v35, %v39
  %v46 = vunpack.c.l.b16 %v31
  %v47 = vunpack.c.l.b16 %v32
  %v48 = vunpack.c.l.b16 %v33
  %v49 = vunpack.c.l.b16 %v34
  %v50 = vpack.c.b16 %v47, %v46
  %v51 = vpack.c.b16 %v49, %v48
  %vm54 = vcmask 261120
  %v56 = vsel %vm54, %v30, 0
  %58 = vmatprep.subr.bf16.mxu0 0
  %59 = vmatpush1.bf16.msra.mxu0 0
  %60 = vmatprep.subr.bf16.mxu0 0
  %61 = vmatpush1.bf16.msra.mxu0 0
  %62 = vmatprep.subr.bf16.mxu0 0
  %63 = vmatpush1.bf16.msra.mxu0 0
  %64 = vmatprep.subr.bf16.mxu0 0
  %65 = vmatpush1.bf16.msra.mxu0 0
  %66 = vmatprep.subr.bf16.mxu0 0
  %67 = vmatpush1.bf16.msra.mxu0 0
  %68 = vmatprep.subr.bf16.mxu0 0
  %69 = vmatpush1.bf16.msra.mxu0 0
  %70 = vmatprep.subr.bf16.mxu0 0
  %71 = vmatpush1.bf16.msra.mxu0 %v51
  %72 = vmatprep.subr.bf16.mxu0 0
  %73 = vmatpush1.bf16.msra.mxu0 %v50
  %74 = vmatprep.subr.bf16.mxu0 0
  %75 = vmatpush2.bf16.msra.mxu0 0
  %76 = vmatprep.subr.bf16.mxu0 0
  %77 = vmatpush2.bf16.msra.mxu0 0
  %78 = vmatprep.subr.bf16.mxu0 0
  %79 = vmatpush2.bf16.msra.mxu0 0
  %80 = vmatprep.subr.bf16.mxu0 0
  %81 = vmatpush2.bf16.msra.mxu0 0
  %82 = vmatprep.subr.bf16.mxu0 0
  %83 = vmatpush2.bf16.msra.mxu0 0
  %84 = vmatprep.subr.bf16.mxu0 0
  %85 = vmatpush2.bf16.msra.mxu0 0
  %86 = vmatprep.subr.bf16.mxu0 0
  %87 = vmatpush2.bf16.msra.mxu0 0
  %88 = vmatprep.subr.bf16.mxu0 0
  %89 = vmatpush2.bf16.msra.mxu0 0
  %90 = vmatprep.mubr.bf16.mxu0 0
  %91 = vmatmul.mubr.bf16.gmra.mxu0 %v56
  %v92 = vpop.f32.mrf.mxu0
  %v93 = vadd.f32 %v40, %v92
  %v94 = vpop.f32.mrf.mxu0
  %v95 = vpop.f32.mrf.mxu0
  %v96 = vpop.f32.mrf.mxu0
  %97 = vdwg.mxu0
  %v98 = vmax.f32 %v93, 0.0
  %v99 = vpack.c.bf16 %v98, %v98
  %v100 = vld [vmem:[%s3] sm:$0xf]
  %v101 = vld [vmem:[%s3 + $0x4] sm:$0xf]
  %v102 = vld [vmem:[%s3 + $0x8] sm:$0xf]
  %v103 = vld [vmem:[%s3 + $0xc] sm:$0xf]
  %v104 = vld [vmem:[%s3 + $0x10] sm:$0xf]
  %v105 = vld [vmem:[%s3 + $0x14] sm:$0xf]
  %v106 = vld [vmem:[%s3 + $0x18] sm:$0x1]
  %v107 = vld [vmem:[%s4] sm:$0x1]
  %v109 = vlaneseq
  %v110 = vshrl.u32 %v109, 7
  %v111 = vsub.s32 0, %v110
  %v112 = vrot.slane %v107, %v111
  %v121 = vunpack.c.l.b16 %v100
  %v122 = vunpack.c.l.b16 %v101
  %v123 = vunpack.c.l.b16 %v102
  %v124 = vunpack.c.l.b16 %v103
  %v125 = vunpack.c.l.b16 %v104
  %v126 = vunpack.c.l.b16 %v105
  %v127 = vunpack.c.l.b16 %v106
  %v128 = vpack.c.b16 %v122, %v121
  %v129 = vpack.c.b16 %v124, %v123
  %v130 = vpack.c.b16 %v126, %v125
  %v131 = vpack.c.b16 %v127, %v127
  %vm135 = vcmask 408576
  %v137 = vsel %vm135, %v99, 0
  %vm139 = vcmask 1040384
  %v141 = vsel %vm139, %v131, 0
  %143 = vmatprep.subr.bf16.mxu0 0
  %144 = vmatpush1.bf16.msra.mxu0 0
  %145 = vmatprep.subr.bf16.mxu0 0
  %146 = vmatpush1.bf16.msra.mxu0 0
  %147 = vmatprep.subr.bf16.mxu0 0
  %148 = vmatpush1.bf16.msra.mxu0 0
  %149 = vmatprep.subr.bf16.mxu0 0
  %150 = vmatpush1.bf16.msra.mxu0 0
  %151 = vmatprep.subr.bf16.mxu0 0
  %152 = vmatpush1.bf16.msra.mxu0 %v141
  %153 = vmatprep.subr.bf16.mxu0 0
  %154 = vmatpush1.bf16.msra.mxu0 %v130
  %155 = vmatprep.subr.bf16.mxu0 0
  %156 = vmatpush1.bf16.msra.mxu0 %v129
  %157 = vmatprep.subr.bf16.mxu0 0
  %158 = vmatpush1.bf16.msra.mxu0 %v128
  %159 = vmatprep.subr.bf16.mxu0 0
  %160 = vmatpush2.bf16.msra.mxu0 0
  %161 = vmatprep.subr.bf16.mxu0 0
  %162 = vmatpush2.bf16.msra.mxu0 0
  %163 = vmatprep.subr.bf16.mxu0 0
  %164 = vmatpush2.bf16.msra.mxu0 0
  %165 = vmatprep.subr.bf16.mxu0 0
  %166 = vmatpush2.bf16.msra.mxu0 0
  %167 = vmatprep.subr.bf16.mxu0 0
  %168 = vmatpush2.bf16.msra.mxu0 0
  %169 = vmatprep.subr.bf16.mxu0 0
  %170 = vmatpush2.bf16.msra.mxu0 0
  %171 = vmatprep.subr.bf16.mxu0 0
  %172 = vmatpush2.bf16.msra.mxu0 0
  %173 = vmatprep.subr.bf16.mxu0 0
  %174 = vmatpush2.bf16.msra.mxu0 0
  %175 = vmatprep.mubr.bf16.mxu0 0
  %176 = vmatmul.mubr.bf16.gmra.mxu0 %v137
  %v177 = vpop.f32.mrf.mxu0
  %v178 = vadd.f32 %v112, %v177
  %v179 = vpop.f32.mrf.mxu0
  %v180 = vpop.f32.mrf.mxu0
  %v181 = vpop.f32.mrf.mxu0
  %182 = vdwg.mxu0
  %v183 = vmax.f32 %v178, 0.0
  %v184 = vld [vmem:[%s5] sm:$0x1]
  %v186 = vlaneseq
  %v187 = vshrl.u32 %v186, 7
  %v188 = vsub.s32 0, %v187
  %v189 = vrot.slane %v184, %v188
  %v191 = vmul.f32 %v183, %v189
  %vm192 = vcmask 162816
  %v193 = vsel %vm192, %v191, 0.0
  %194 = vadd.xlane.f32.xlu0 %v193
  %v195 = vpop.xlane.xlu0 %194
  %v196 = vld [vmem:[#allocation2] sm:$0x1]
  %v198 = vlaneseq
  %v199 = vshrl.u32 %v198, 7
  %v200 = vsub.s32 0, %v199
  %v201 = vrot.slane %v196, %v200
  %v203 = vadd.f32 %v195, %v201
  %vm204 = vcmask 7168
  %205 = vst.msk [vmem:[%s7] sm:$0xff] %vm204, %v203
  // Predicated region
  $region30: #{regression_net_forward.1} parent=0 // pred_check
    _
  $region31: #{regression_net_forward.1} parent=0 // pred_check_branch
    %207 = sbr.rel (0) target = $region33
  $region32: #{regression_net_forward.1} parent=0 // pred_region
    _
  $region33: #{regression_net_forward.1} parent=0 // pred_fallthru
    _
  // Predicated region
  $region34: #{regression_net_forward.1} parent=0 // pred_check
    _
  $region35: #{regression_net_forward.1} parent=0 // pred_check_branch
    %209 = sbr.rel (0) target = $region37
  $region36: #{regression_net_forward.1} parent=0 // pred_region
    _
  $region37: #{regression_net_forward.1} parent=0 // pred_fallthru
    _

</llo_original>
